<compile_context>
chip_gen: v5e
topology: v5e:2x2
jax: 0.10.0
libtpu: 0.0.40
codegen_flags: <defaults>
</compile_context>

<pallas_src>
import math
from functools import partial

import jax
import jax.numpy as jnp
from jax import lax
from jax.experimental import pallas as pl
from jax.experimental.pallas import tpu as pltpu


LANE = 128            # vreg lane width / minimum lane-dense N (keep at 128)
MAX_TILE_B = 2048     # tunable batch tile: amortizes ~0.35us per-step overhead
MIN_SPLIT_B = 256     # below this, one block (don't split tiny batches)


def _round_up(x, m):
    return ((x + m - 1) // m) * m


def _cdiv(a, b):
    return -(-a // b)


# ----------------------------------------------------------------------------
# Pallas kernel: fused (policy + value) 3-layer MLP forward
# ----------------------------------------------------------------------------
def _fused_mlp_kernel(ob_ref, w1_ref, b1_ref, w2_ref, b2_ref, w3_ref, b3_ref,
                      out_ref, *, exp_lo, exp_hi):
    mxu_dtype = w1_ref.dtype            # bf16 fused weights by default

    x = ob_ref[...].astype(mxu_dtype)
    # layer 1: one lane-dense matmul covers both branches (concatenated cols)
    h = jnp.dot(x, w1_ref[...], preferred_element_type=jnp.float32) + b1_ref[...]
    h = jnp.maximum(h, 0.0)                                  # f32 VPU (v5e-safe)
    # layer 2: block-diagonal keeps the branches independent
    h = jnp.dot(h.astype(mxu_dtype), w2_ref[...],
                preferred_element_type=jnp.float32) + b2_ref[...]
    h = jnp.maximum(h, 0.0)
    # layer 3: block-diagonal -> [logits | value | zero padding] in one slab
    out = jnp.dot(h.astype(mxu_dtype), w3_ref[...],
                  preferred_element_type=jnp.float32) + b3_ref[...]
    # continuous-action epilogue: exp() the logstd columns in-kernel (EUP slot
    # is otherwise idle here, so this is free).
    if exp_hi > exp_lo:
        col = lax.broadcasted_iota(jnp.int32, out.shape, 1)
        sel = (col >= exp_lo) & (col < exp_hi)
        out = jnp.where(sel, jnp.exp(out), out)
    out_ref[...] = out.astype(out_ref.dtype)


# ----------------------------------------------------------------------------
# Batch-tile chooser: big tiles, but >=2 balanced steps for v7x 2-TC sharding
# ----------------------------------------------------------------------------
def _choose_tile_b(b8):
    if b8 < MIN_SPLIT_B:
        return b8                                   # tiny batch: one block
    n_blocks = max(2, _cdiv(b8, MAX_TILE_B))        # >=2 parallel grid steps
    return _round_up(_cdiv(b8, n_blocks), 8)        # balanced, 8-row aligned


# ----------------------------------------------------------------------------
# Wrapper: batch-tiled pallas_call with VMEM-resident fused weights
# ----------------------------------------------------------------------------
def _run_fused_mlp(ob, fused_params, *, exp_lo=0, exp_hi=0,
                   out_dtype=jnp.float32):
    """Runs the fused kernel; returns the (B, OUT_PAD) output slab."""
    w1, b1, w2, b2, w3, b3 = fused_params
    B, ob_dim = ob.shape
    H1, H2, OUT = w1.shape[1], w2.shape[1], w3.shape[1]

    # Pad only to a multiple of 8 rows (<=7 rows, negligible traffic); the last
    # grid block may be partial -> Pallas masks the boundary reads/writes.
    b8 = _round_up(B, 8)
    ob_p = ob if b8 == B else jnp.pad(ob, ((0, b8 - B), (0, 0)))
    tile_b = _choose_tile_b(b8)
    grid = (_cdiv(b8, tile_b),)

    f32 = jnp.dtype(jnp.float32).itemsize
    ob_isz = jnp.dtype(ob.dtype).itemsize
    out_isz = jnp.dtype(out_dtype).itemsize
    w_isz = jnp.dtype(w1.dtype).itemsize
    w_bytes = sum(int(w.size) * jnp.dtype(w.dtype).itemsize for w in (w1, w2, w3))
    b_bytes = (H1 + H2 + OUT) * f32

    flops = 2 * b8 * (ob_dim * H1 + H1 * H2 + H2 * OUT)
    bytes_accessed = (b8 * ob_dim * ob_isz + w_bytes + b_bytes
                      + b8 * OUT * out_isz)

    # scoped-VMEM request derived from the actual footprint:
    #   2x (double-buffered) ob/out blocks + 2x resident weights/biases
    #   + in-kernel intermediates (h/out in f32 + their bf16 casts) + slack.
    block_io = tile_b * (ob_dim * ob_isz + OUT * out_isz)
    interm = tile_b * (H1 + H2 + OUT) * (f32 + w_isz)
    vmem_needed = 2 * block_io + 2 * (w_bytes + b_bytes) + interm
    vmem_limit = int(min(max(vmem_needed + (4 << 20), 16 << 20), 48 << 20))

    kernel = partial(_fused_mlp_kernel, exp_lo=exp_lo, exp_hi=exp_hi)
    out = pl.pallas_call(
        kernel,
        out_shape=jax.ShapeDtypeStruct((b8, OUT), out_dtype),
        grid=grid,
        in_specs=[
            # observation: pipelined per batch tile
            pl.BlockSpec((tile_b, ob_dim), lambda i: (i, 0)),
            # fused weights / biases: constant index_map -> VMEM-resident
            pl.BlockSpec(w1.shape, lambda i: (0, 0)),
            pl.BlockSpec(b1.shape, lambda i: (0, 0)),
            pl.BlockSpec(w2.shape, lambda i: (0, 0)),
            pl.BlockSpec(b2.shape, lambda i: (0, 0)),
            pl.BlockSpec(w3.shape, lambda i: (0, 0)),
            pl.BlockSpec(b3.shape, lambda i: (0, 0)),
        ],
        # single lane-dense output slab (no masked narrow stores)
        out_specs=pl.BlockSpec((tile_b, OUT), lambda i: (i, 0)),
        compiler_params=pltpu.CompilerParams(
            dimension_semantics=("parallel",),       # megacore / v7x 2-TC shard
            vmem_limit_bytes=vmem_limit,
        ),
        cost_estimate=pl.CostEstimate(
            flops=int(flops),
            transcendentals=int(b8 * max(exp_hi - exp_lo, 0)),
            bytes_accessed=int(bytes_accessed)),
    )(ob_p, w1, b1, w2, b2, w3, b3)

    return out[:B]


def actor_critic_forward(ob, fused_params, out_dim):
    """Raw (action_logits (B,out_dim), value (B,1)) — no exp epilogue."""
    out = _run_fused_mlp(ob, fused_params)
    return out[:, :out_dim], out[:, out_dim:out_dim + 1]


# ----------------------------------------------------------------------------
# Parameter init (mirrors nn.Linear default init) + init-time branch fusion
# ----------------------------------------------------------------------------
def init_params(key, ob_dim, policy_out_dim, policy_size, vf_size):
    """Per-branch params, weights stored as (in, out), biases as (1, out)."""
    def linear(key, fan_in, fan_out):
        kw, kb = jax.random.split(key)
        bound = 1.0 / math.sqrt(fan_in)
        w = jax.random.uniform(kw, (fan_in, fan_out), jnp.float32, -bound, bound)
        b = jax.random.uniform(kb, (1, fan_out), jnp.float32, -bound, bound)
        return w, b

    keys = jax.random.split(key, 6)
    pw1, pb1 = linear(keys[0], ob_dim, policy_size[0])
    pw2, pb2 = linear(keys[1], policy_size[0], policy_size[1])
    pw3, pb3 = linear(keys[2], policy_size[1], policy_out_dim)
    vw1, vb1 = linear(keys[3], ob_dim, vf_size[0])
    vw2, vb2 = linear(keys[4], vf_size[0], vf_size[1])
    vw3, vb3 = linear(keys[5], vf_size[1], 1)
    return (pw1, pb1, pw2, pb2, pw3, pb3,
            vw1, vb1, vw2, vb2, vw3, vb3)


def fuse_params(params, out_dim, use_bf16=True):
    """One-time fusion of policy/value branches into a single MLP:
    concatenated layer-1, block-diagonal layers 2 & 3, widths padded to a
    multiple of 128 lanes.  Zero blocks are exactly zero so branches can't
    leak.  Weights default to bf16 (MXU-native everywhere); biases stay f32."""
    (pw1, pb1, pw2, pb2, pw3, pb3,
     vw1, vb1, vw2, vb2, vw3, vb3) = params
    ob_dim = pw1.shape[0]
    p1, v1 = pw1.shape[1], vw1.shape[1]
    p2, v2 = pw2.shape[1], vw2.shape[1]

    H1 = _round_up(p1 + v1, LANE)
    H2 = _round_up(p2 + v2, LANE)
    OUT = _round_up(out_dim + 1, LANE)

    w1 = jnp.zeros((ob_dim, H1), jnp.float32)
    w1 = w1.at[:, :p1].set(pw1).at[:, p1:p1 + v1].set(vw1)
    b1 = jnp.zeros((1, H1), jnp.float32)
    b1 = b1.at[:, :p1].set(pb1).at[:, p1:p1 + v1].set(vb1)

    w2 = jnp.zeros((H1, H2), jnp.float32)
    w2 = w2.at[:p1, :p2].set(pw2).at[p1:p1 + v1, p2:p2 + v2].set(vw2)
    b2 = jnp.zeros((1, H2), jnp.float32)
    b2 = b2.at[:, :p2].set(pb2).at[:, p2:p2 + v2].set(vb2)

    w3 = jnp.zeros((H2, OUT), jnp.float32)
    w3 = w3.at[:p2, :out_dim].set(pw3)
    w3 = w3.at[p2:p2 + v2, out_dim:out_dim + 1].set(vw3)
    b3 = jnp.zeros((1, OUT), jnp.float32)
    b3 = b3.at[:, :out_dim].set(pb3).at[:, out_dim:out_dim + 1].set(vb3)

    if use_bf16:
        w1, w2, w3 = (w1.astype(jnp.bfloat16), w2.astype(jnp.bfloat16),
                      w3.astype(jnp.bfloat16))
    return (w1, b1, w2, b2, w3, b3)


# ----------------------------------------------------------------------------
# "Network.forward" equivalent: distribution params + value
# ----------------------------------------------------------------------------
def network_forward(ob, fused_params, out_dim, discrete):
    if discrete:
        # Categorical(logits=action_logits) — logits fully characterize it.
        out = _run_fused_mlp(ob, fused_params)
        return (out[:, :out_dim],), out[:, out_dim:out_dim + 1]
    # Continuous: torch.split(logits, out_dim//2) -> Normal(mean, logstd.exp())
    # exp() of the logstd columns is fused into the kernel epilogue.
    half = out_dim // 2
    out = _run_fused_mlp(ob, fused_params, exp_lo=half, exp_hi=out_dim)
    mean = out[:, :half]
    std = out[:, half:out_dim]
    value = out[:, out_dim:out_dim + 1]
    return (mean, std), value


# ----------------------------------------------------------------------------
if __name__ == "__main__":
    key = jax.random.PRNGKey(0)
    k_ob, k_par = jax.random.split(key)

    # small shapes consistent with the module
    B = 8
    ob_dim = 32
    policy_size = (64, 64)
    vf_size = (64, 64)
    policy_out_dim = 8          # continuous: split into mean(4) / logstd(4)
    discrete = False

    ob = jax.random.normal(k_ob, (B, ob_dim), dtype=jnp.float32)
    params = init_params(k_par, ob_dim, policy_out_dim, policy_size, vf_size)
    fused = fuse_params(params, policy_out_dim, use_bf16=True)

    (dist_params, value) = network_forward(ob, fused, policy_out_dim, discrete)
    mean, std = dist_params
    jax.block_until_ready((mean, std, value))

    # pure-JAX f32 reference check (per-branch, unfused); tolerances loosened
    # for the bf16 MXU operands.
    (pw1, pb1, pw2, pb2, pw3, pb3, vw1, vb1, vw2, vb2, vw3, vb3) = params
    h = jnp.maximum(ob @ pw1 + pb1, 0.0)
    h = jnp.maximum(h @ pw2 + pb2, 0.0)
    logits_ref = h @ pw3 + pb3
    v = jnp.maximum(ob @ vw1 + vb1, 0.0)
    v = jnp.maximum(v @ vw2 + vb2, 0.0)
    value_ref = v @ vw3 + vb3
    assert jnp.allclose(mean, logits_ref[:, :4], rtol=3e-2, atol=3e-2)
    assert jnp.allclose(std, jnp.exp(logits_ref[:, 4:]), rtol=3e-2, atol=3e-2)
    assert jnp.allclose(value, value_ref, rtol=3e-2, atol=3e-2)
    assert mean.shape == (B, 4) and std.shape == (B, 4) and value.shape == (B, 1)

    print("KERNEL_OK")
</pallas_src>

<mosaic_0001>
module attributes {stable_mosaic.version = 11 : i64} {
  func.func @_fused_mlp_kernel(%arg0: i32, %arg1: memref<8x32xf32, #tpu.memory_space<vmem>>, %arg2: memref<32x128xbf16, #tpu.memory_space<vmem>>, %arg3: memref<1x128xf32, #tpu.memory_space<vmem>>, %arg4: memref<128x128xbf16, #tpu.memory_space<vmem>>, %arg5: memref<1x128xf32, #tpu.memory_space<vmem>>, %arg6: memref<128x128xbf16, #tpu.memory_space<vmem>>, %arg7: memref<1x128xf32, #tpu.memory_space<vmem>>, %arg8: memref<8x128xf32, #tpu.memory_space<vmem>>) attributes {dimension_semantics = [#tpu.dimension_semantics<parallel>], iteration_bounds = array<i64: 1>, scalar_prefetch = 0 : i64, scratch_operands = 0 : i64, tpu.core_type = #tpu.core_type<tc>, window_params = [{transform_indices = @transform_0, window_bounds = array<i64: 8, 32>}, {pipeline_mode = #tpu.pipeline_mode<synchronous>, transform_indices = @transform_1, window_bounds = array<i64: 32, 128>}, {pipeline_mode = #tpu.pipeline_mode<synchronous>, transform_indices = @transform_2, window_bounds = array<i64: 1, 128>}, {pipeline_mode = #tpu.pipeline_mode<synchronous>, transform_indices = @transform_3, window_bounds = array<i64: 128, 128>}, {pipeline_mode = #tpu.pipeline_mode<synchronous>, transform_indices = @transform_4, window_bounds = array<i64: 1, 128>}, {pipeline_mode = #tpu.pipeline_mode<synchronous>, transform_indices = @transform_5, window_bounds = array<i64: 128, 128>}, {pipeline_mode = #tpu.pipeline_mode<synchronous>, transform_indices = @transform_6, window_bounds = array<i64: 1, 128>}, {transform_indices = @transform_7, window_bounds = array<i64: 8, 128>}]} {
    %c0 = arith.constant 0 : index
    %c0_0 = arith.constant 0 : index
    %0 = vector.load %arg1[%c0, %c0_0] : memref<8x32xf32, #tpu.memory_space<vmem>>, vector<8x32xf32>
    %1 = arith.truncf %0 : vector<8x32xf32> to vector<8x32xbf16>
    %c0_1 = arith.constant 0 : index
    %c0_2 = arith.constant 0 : index
    %2 = vector.load %arg2[%c0_1, %c0_2] : memref<32x128xbf16, #tpu.memory_space<vmem>>, vector<32x128xbf16>
    %cst = arith.constant dense<0.000000e+00> : vector<8x128xf32>
    %3 = tpu.matmul %1, %2, %cst {dimension_numbers = #tpu.dot_dimension_numbers<[1], [0], [0], [1], [0, 0, 1, 1], [], []>} : vector<8x32xbf16>, vector<32x128xbf16>, vector<8x128xf32> -> vector<8x128xf32>
    %c0_3 = arith.constant 0 : index
    %c0_4 = arith.constant 0 : index
    %4 = vector.load %arg3[%c0_3, %c0_4] : memref<1x128xf32, #tpu.memory_space<vmem>>, vector<1x128xf32>
    %5 = vector.broadcast %4 : vector<1x128xf32> to vector<8x128xf32>
    %6 = arith.addf %3, %5 : vector<8x128xf32>
    %cst_5 = arith.constant 0.000000e+00 : f32
    %7 = vector.broadcast %cst_5 : f32 to vector<8x128xf32>
    %8 = arith.maximumf %6, %7 : vector<8x128xf32>
    %9 = arith.truncf %8 : vector<8x128xf32> to vector<8x128xbf16>
    %c0_6 = arith.constant 0 : index
    %c0_7 = arith.constant 0 : index
    %10 = vector.load %arg4[%c0_6, %c0_7] : memref<128x128xbf16, #tpu.memory_space<vmem>>, vector<128x128xbf16>
    %cst_8 = arith.constant dense<0.000000e+00> : vector<8x128xf32>
    %11 = tpu.matmul %9, %10, %cst_8 {dimension_numbers = #tpu.dot_dimension_numbers<[1], [0], [0], [1], [0, 0, 1, 1], [], []>} : vector<8x128xbf16>, vector<128x128xbf16>, vector<8x128xf32> -> vector<8x128xf32>
    %c0_9 = arith.constant 0 : index
    %c0_10 = arith.constant 0 : index
    %12 = vector.load %arg5[%c0_9, %c0_10] : memref<1x128xf32, #tpu.memory_space<vmem>>, vector<1x128xf32>
    %13 = vector.broadcast %12 : vector<1x128xf32> to vector<8x128xf32>
    %14 = arith.addf %11, %13 : vector<8x128xf32>
    %cst_11 = arith.constant 0.000000e+00 : f32
    %15 = vector.broadcast %cst_11 : f32 to vector<8x128xf32>
    %16 = arith.maximumf %14, %15 : vector<8x128xf32>
    %17 = arith.truncf %16 : vector<8x128xf32> to vector<8x128xbf16>
    %c0_12 = arith.constant 0 : index
    %c0_13 = arith.constant 0 : index
    %18 = vector.load %arg6[%c0_12, %c0_13] : memref<128x128xbf16, #tpu.memory_space<vmem>>, vector<128x128xbf16>
    %cst_14 = arith.constant dense<0.000000e+00> : vector<8x128xf32>
    %19 = tpu.matmul %17, %18, %cst_14 {dimension_numbers = #tpu.dot_dimension_numbers<[1], [0], [0], [1], [0, 0, 1, 1], [], []>} : vector<8x128xbf16>, vector<128x128xbf16>, vector<8x128xf32> -> vector<8x128xf32>
    %c0_15 = arith.constant 0 : index
    %c0_16 = arith.constant 0 : index
    %20 = vector.load %arg7[%c0_15, %c0_16] : memref<1x128xf32, #tpu.memory_space<vmem>>, vector<1x128xf32>
    %21 = vector.broadcast %20 : vector<1x128xf32> to vector<8x128xf32>
    %22 = arith.addf %19, %21 : vector<8x128xf32>
    %23 = tpu.iota {dimensions = array<i32: 1>} : vector<8x128xi32>
    %c4_i32 = arith.constant 4 : i32
    %24 = vector.broadcast %c4_i32 : i32 to vector<8x128xi32>
    %25 = arith.cmpi sge, %23, %24 : vector<8x128xi32>
    %c8_i32 = arith.constant 8 : i32
    %26 = vector.broadcast %c8_i32 : i32 to vector<8x128xi32>
    %27 = arith.cmpi slt, %23, %26 : vector<8x128xi32>
    %28 = arith.andi %25, %27 : vector<8x128xi1>
    %29 = math.exp %22 : vector<8x128xf32>
    %30 = arith.select %28, %29, %22 : vector<8x128xi1>, vector<8x128xf32>
    %c0_17 = arith.constant 0 : index
    %c0_18 = arith.constant 0 : index
    %31 = vector.load %arg8[%c0_17, %c0_18] : memref<8x128xf32, #tpu.memory_space<vmem>>, vector<8x128xf32>
    tpu.vector_store %arg8[%c0_17, %c0_18], %30 {strides = array<i32>} : memref<8x128xf32, #tpu.memory_space<vmem>>, vector<8x128xf32>,
    return
  }
  func.func @transform_0(%arg0: i32) -> (i32, i32) {
    %c0_i32 = arith.constant 0 : i32
    %c0_i32_0 = arith.constant 0 : i32
    return %arg0, %c0_i32 : i32, i32
  }
  func.func @transform_1(%arg0: i32) -> (i32, i32) {
    %c0_i32 = arith.constant 0 : i32
    %c0_i32_0 = arith.constant 0 : i32
    %c0_i32_1 = arith.constant 0 : i32
    return %c0_i32, %c0_i32_0 : i32, i32
  }
  func.func @transform_2(%arg0: i32) -> (i32, i32) {
    %c0_i32 = arith.constant 0 : i32
    %c0_i32_0 = arith.constant 0 : i32
    %c0_i32_1 = arith.constant 0 : i32
    return %c0_i32, %c0_i32_0 : i32, i32
  }
  func.func @transform_3(%arg0: i32) -> (i32, i32) {
    %c0_i32 = arith.constant 0 : i32
    %c0_i32_0 = arith.constant 0 : i32
    %c0_i32_1 = arith.constant 0 : i32
    return %c0_i32, %c0_i32_0 : i32, i32
  }
  func.func @transform_4(%arg0: i32) -> (i32, i32) {
    %c0_i32 = arith.constant 0 : i32
    %c0_i32_0 = arith.constant 0 : i32
    %c0_i32_1 = arith.constant 0 : i32
    return %c0_i32, %c0_i32_0 : i32, i32
  }
  func.func @transform_5(%arg0: i32) -> (i32, i32) {
    %c0_i32 = arith.constant 0 : i32
    %c0_i32_0 = arith.constant 0 : i32
    %c0_i32_1 = arith.constant 0 : i32
    return %c0_i32, %c0_i32_0 : i32, i32
  }
  func.func @transform_6(%arg0: i32) -> (i32, i32) {
    %c0_i32 = arith.constant 0 : i32
    %c0_i32_0 = arith.constant 0 : i32
    %c0_i32_1 = arith.constant 0 : i32
    return %c0_i32, %c0_i32_0 : i32, i32
  }
  func.func @transform_7(%arg0: i32) -> (i32, i32) {
    %c0_i32 = arith.constant 0 : i32
    %c0_i32_0 = arith.constant 0 : i32
    return %arg0, %c0_i32 : i32, i32
  }
}

</mosaic_0001>

<llo_original>
// kernel: tpu_custom_call.1
$region0: #{tpu_custom_call.1}
  #allocation0 [shape = 'u32[]', space=smem, size = 0x4, offset = 0x4, fixed_abs, tag = 'smem constant byte address 0x4 - core index']
  #allocation1 [shape = 'u32[72,128]{1,0:T(1,128)}', space=vmem, size = 0x9000, scoped, tag = 'internal scratch']
  %s0 = inlined_call_operand.hbm [shape: f32[8,32], index: 0, kind: input, shape index: {}]
  %s1 = inlined_call_operand.hbm [shape: bf16[32,128], index: 1, kind: input, shape index: {}]
  %s2 = inlined_call_operand.vmem [shape: f32[1,128], index: 2, kind: input, shape index: {}]
  %s3 = inlined_call_operand.hbm [shape: bf16[128,128], index: 3, kind: input, shape index: {}]
  %s4 = inlined_call_operand.vmem [shape: f32[1,128], index: 4, kind: input, shape index: {}]
  %s5 = inlined_call_operand.hbm [shape: bf16[128,128], index: 5, kind: input, shape index: {}]
  %s6 = inlined_call_operand.vmem [shape: f32[1,128], index: 6, kind: input, shape index: {}]
  %s7 = inlined_call_operand.hbm [shape: f32[8,128], index: 7, kind: output, shape index: {}]
  %s8 = sld [smem:[#allocation0]]
  $region54: #{tpu_custom_call.1} parent=0
    _
  %s10 = ssub.s32 1, %s8
  %s11 = scalar_select 0, %s10, %s8
  $region1: #{tpu_custom_call.1} parent=0
    #allocation2 [shape = 'u8[4096]{0}', space=vmem, size = 0x1000, scoped, tag = 'input window, operand 0, single buffered']
    #allocation3 [shape = 's32[1]{0}', space=sflag, size = 0x4, scoped, tag = 'scoped memory for tpu_custom_call.1']
    #allocation4 [shape = 's32[1]{0}', space=sflag, size = 0x4, scoped, tag = 'scoped memory for tpu_custom_call.1']
    #allocation5 [shape = 'u8[8192]{0}', space=vmem, size = 0x2000, scoped, tag = 'input window, operand 1, single buffered']
    #allocation6 [shape = 's32[1]{0}', space=sflag, size = 0x4, scoped, tag = 'scoped memory for tpu_custom_call.1']
    #allocation7 [shape = 'u8[32768]{0}', space=vmem, size = 0x8000, scoped, tag = 'input window, operand 3, single buffered']
    #allocation8 [shape = 'u8[32768]{0}', space=vmem, size = 0x8000, scoped, tag = 'input window, operand 5, single buffered']
    #allocation9 [shape = 's32[1]{0}', space=sflag, size = 0x4, scoped, tag = 'scoped memory for tpu_custom_call.1']
    #allocation10 [shape = 'u8[4096]{0}', space=vmem, size = 0x1000, scoped, tag = 'output window, operand 0, single buffered']
    %12 = vsyncpa [#allocation3], 0
    %13 = vsyncpa [#allocation6], 0
    %14 = vsyncpa [#allocation9], 0
    %15 = vsyncpa [#allocation4], 0
    // Predicated region
    $region2: #{tpu_custom_call.1} parent=1 // pred_check
      _
    $region3: #{tpu_custom_call.1} parent=1 // pred_check_branch
      %17 = sbr.rel (0) target = $region5
    $region4: #{tpu_custom_call.1} parent=1 // pred_region
      %19 = vsyncadd [#allocation3], 0
      %s21 = sshll.u32 %s0, 4
      %s22 = int_to_ptr.hbm [resolvable:$true] %s21
      %s23 = sshll.u32 [#allocation2], 4
      %s24 = int_to_ptr.vmem [resolvable:$true] %s23
      %26 = dma.hbm_to_vmem [thread:$0]  %s22, 128, %s24, [#allocation3]
    $region5: #{tpu_custom_call.1} parent=1 // pred_fallthru
      _
    // Predicated region
    $region6: #{tpu_custom_call.1} parent=1 // pred_check
      _
    $region7: #{tpu_custom_call.1} parent=1 // pred_check_branch
      %28 = sbr.rel (0) target = $region9
    $region8: #{tpu_custom_call.1} parent=1 // pred_region
      %30 = vsyncadd [#allocation6], 0
      %s31 = sshll.u32 %s1, 4
      %s32 = int_to_ptr.hbm [resolvable:$true] %s31
      %s33 = sshll.u32 [#allocation5], 4
      %s34 = int_to_ptr.vmem [resolvable:$true] %s33
      %39 = dma.hbm_to_vmem [thread:$0]  %s32, 256, %s34, [#allocation6], 64, 64, 4
    $region9: #{tpu_custom_call.1} parent=1 // pred_fallthru
      _
    // Predicated region
    $region10: #{tpu_custom_call.1} parent=1 // pred_check
      _
    $region11: #{tpu_custom_call.1} parent=1 // pred_check_branch
      %41 = sbr.rel (0) target = $region13
    $region12: #{tpu_custom_call.1} parent=1 // pred_region
      _
    $region13: #{tpu_custom_call.1} parent=1 // pred_fallthru
      _
    // Predicated region
    $region14: #{tpu_custom_call.1} parent=1 // pred_check
      _
    $region15: #{tpu_custom_call.1} parent=1 // pred_check_branch
      %43 = sbr.rel (0) target = $region17
    $region16: #{tpu_custom_call.1} parent=1 // pred_region
      %45 = vsyncadd [#allocation6], 0
      %s46 = sshll.u32 %s3, 4
      %s47 = int_to_ptr.hbm [resolvable:$true] %s46
      %s48 = sshll.u32 [#allocation7], 4
      %s49 = int_to_ptr.vmem [resolvable:$true] %s48
      %54 = dma.hbm_to_vmem [thread:$0]  %s47, 1024, %s49, [#allocation6], 64, 64, 4
    $region17: #{tpu_custom_call.1} parent=1 // pred_fallthru
      _
    // Predicated region
    $region18: #{tpu_custom_call.1} parent=1 // pred_check
      _
    $region19: #{tpu_custom_call.1} parent=1 // pred_check_branch
      %56 = sbr.rel (0) target = $region21
    $region20: #{tpu_custom_call.1} parent=1 // pred_region
      _
    $region21: #{tpu_custom_call.1} parent=1 // pred_fallthru
      _
    // Predicated region
    $region22: #{tpu_custom_call.1} parent=1 // pred_check
      _
    $region23: #{tpu_custom_call.1} parent=1 // pred_check_branch
      %58 = sbr.rel (0) target = $region25
    $region24: #{tpu_custom_call.1} parent=1 // pred_region
      %60 = vsyncadd [#allocation9], 0
      %s61 = sshll.u32 %s5, 4
      %s62 = int_to_ptr.hbm [resolvable:$true] %s61
      %s63 = sshll.u32 [#allocation8], 4
      %s64 = int_to_ptr.vmem [resolvable:$true] %s63
      %69 = dma.hbm_to_vmem [thread:$0]  %s62, 1024, %s64, [#allocation9], 64, 64, 4
    $region25: #{tpu_custom_call.1} parent=1 // pred_fallthru
      _
    // Predicated region
    $region26: #{tpu_custom_call.1} parent=1 // pred_check
      _
    $region27: #{tpu_custom_call.1} parent=1 // pred_check_branch
      %71 = sbr.rel (0) target = $region29
    $region28: #{tpu_custom_call.1} parent=1 // pred_region
      _
    $region29: #{tpu_custom_call.1} parent=1 // pred_fallthru
      _
    // Predicated region
    $region30: #{tpu_custom_call.1} parent=1 // pred_check
      _
    $region31: #{tpu_custom_call.1} parent=1 // pred_check_branch
      %73 = sbr.rel (0) target = $region33
    $region32: #{tpu_custom_call.1} parent=1 // pred_region
      %75 = dma.done [#allocation3], 128
    $region33: #{tpu_custom_call.1} parent=1 // pred_fallthru
      _
    // Predicated region
    $region34: #{tpu_custom_call.1} parent=1 // pred_check
      _
    $region35: #{tpu_custom_call.1} parent=1 // pred_check_branch
      %77 = sbr.rel (0) target = $region37
    $region36: #{tpu_custom_call.1} parent=1 // pred_region
      %79 = dma.done [#allocation6], 256
    $region37: #{tpu_custom_call.1} parent=1 // pred_fallthru
      _
    // Predicated region
    $region38: #{tpu_custom_call.1} parent=1 // pred_check
      _
    $region39: #{tpu_custom_call.1} parent=1 // pred_check_branch
      %81 = sbr.rel (0) target = $region41
    $region40: #{tpu_custom_call.1} parent=1 // pred_region
      %83 = dma.done [#allocation6], 1024
    $region41: #{tpu_custom_call.1} parent=1 // pred_fallthru
      _
    // Predicated region
    $region42: #{tpu_custom_call.1} parent=1 // pred_check
      _
    $region43: #{tpu_custom_call.1} parent=1 // pred_check_branch
      %85 = sbr.rel (0) target = $region45
    $region44: #{tpu_custom_call.1} parent=1 // pred_region
      %87 = dma.done [#allocation9], 1024
    $region45: #{tpu_custom_call.1} parent=1 // pred_fallthru
      _
    %v89 = vld [vmem:[#allocation2] sm:$0xff]
    %v90 = vpack.c.bf16 %v89, %v89
    %v91 = vld [vmem:[#allocation5] sm:$0xf]
    %v92 = vld [vmem:[#allocation5 + $0x4] sm:$0xf]
    %v93 = vld [vmem:[#allocation5 + $0x8] sm:$0xf]
    %v94 = vld [vmem:[#allocation5 + $0xc] sm:$0xf]
    %v95 = vld [vmem:[%s2] sm:$0x1]
    %v97 = vperm.slane %v95, 0
    %v103 = vunpack.c.l.b16 %v91
    %v104 = vunpack.c.l.b16 %v92
    %v105 = vunpack.c.l.b16 %v93
    %v106 = vunpack.c.l.b16 %v94
    %v107 = vpack.c.b16 %v104, %v103
    %v108 = vpack.c.b16 %v106, %v105
    %vm111 = vcmask 261120
    %v113 = vsel %vm111, %v90, 0
    %115 = vmatpush.bf16.msra.mxu0 0
    %116 = vmatpush.bf16.msra.mxu0 0
    %117 = vmatpush.bf16.msra.mxu0 0
    %118 = vmatpush.bf16.msra.mxu0 0
    %119 = vmatpush.bf16.msra.mxu0 0
    %120 = vmatpush.bf16.msra.mxu0 0
    %121 = vmatpush.bf16.msra.mxu0 %v108
    %122 = vmatpush.bf16.msra.mxu0 %v107
    %123 = vmatmul.bf16.gmra.mxu0 %v113
    %v124 = vpop.f32.mrf.mxu0
    %v125 = vadd.f32 %v97, %v124
    %v126 = vpop.f32.mrf.mxu0
    %127 = vdwg.mxu0
    %v128 = vmax.f32 %v125, 0.0
    %v129 = vpack.c.bf16 %v128, %v128
    %v130 = vld [vmem:[#allocation7] sm:$0xf]
    %v131 = vld [vmem:[#allocation7 + $0x4] sm:$0xf]
    %v132 = vld [vmem:[#allocation7 + $0x8] sm:$0xf]
    %v133 = vld [vmem:[#allocation7 + $0xc] sm:$0xf]
    %v134 = vld [vmem:[#allocation7 + $0x10] sm:$0xf]
    %v135 = vld [vmem:[#allocation7 + $0x14] sm:$0xf]
    %v136 = vld [vmem:[#allocation7 + $0x18] sm:$0xf]
    %v137 = vld [vmem:[#allocation7 + $0x1c] sm:$0xf]
    %v138 = vld [vmem:[#allocation7 + $0x20] sm:$0xf]
    %v139 = vld [vmem:[#allocation7 + $0x24] sm:$0xf]
    %v140 = vld [vmem:[#allocation7 + $0x28] sm:$0xf]
    %v141 = vld [vmem:[#allocation7 + $0x2c] sm:$0xf]
    %v142 = vld [vmem:[#allocation7 + $0x30] sm:$0xf]
    %v143 = vld [vmem:[#allocation7 + $0x34] sm:$0xf]
    %v144 = vld [vmem:[#allocation7 + $0x38] sm:$0xf]
    %v145 = vld [vmem:[#allocation7 + $0x3c] sm:$0xf]
    %v146 = vld [vmem:[%s4] sm:$0x1]
    %v148 = vperm.slane %v146, 0
    %v166 = vunpack.c.l.b16 %v130
    %v167 = vunpack.c.l.b16 %v131
    %v168 = vunpack.c.l.b16 %v132
    %v169 = vunpack.c.l.b16 %v133
    %v170 = vunpack.c.l.b16 %v134
    %v171 = vunpack.c.l.b16 %v135
    %v172 = vunpack.c.l.b16 %v136
    %v173 = vunpack.c.l.b16 %v137
    %v174 = vunpack.c.l.b16 %v138
    %v175 = vunpack.c.l.b16 %v139
    %v176 = vunpack.c.l.b16 %v140
    %v177 = vunpack.c.l.b16 %v141
    %v178 = vunpack.c.l.b16 %v142
    %v179 = vunpack.c.l.b16 %v143
    %v180 = vunpack.c.l.b16 %v144
    %v181 = vunpack.c.l.b16 %v145
    %v182 = vpack.c.b16 %v167, %v166
    %v183 = vpack.c.b16 %v169, %v168
    %v184 = vpack.c.b16 %v171, %v170
    %v185 = vpack.c.b16 %v173, %v172
    %v186 = vpack.c.b16 %v175, %v174
    %v187 = vpack.c.b16 %v177, %v176
    %v188 = vpack.c.b16 %v179, %v178
    %v189 = vpack.c.b16 %v181, %v180
    %198 = vmatpush.bf16.msra.mxu0 %v189
    %199 = vmatpush.bf16.msra.mxu0 %v188
    %200 = vmatpush.bf16.msra.mxu0 %v187
    %201 = vmatpush.bf16.msra.mxu0 %v186
    %202 = vmatpush.bf16.msra.mxu0 %v185
    %203 = vmatpush.bf16.msra.mxu0 %v184
    %204 = vmatpush.bf16.msra.mxu0 %v183
    %205 = vmatpush.bf16.msra.mxu0 %v182
    %206 = vmatmul.bf16.gmra.mxu0 %v129
    %v207 = vpop.f32.mrf.mxu0
    %v208 = vadd.f32 %v148, %v207
    %v209 = vpop.f32.mrf.mxu0
    %210 = vdwg.mxu0
    %v211 = vmax.f32 %v208, 0.0
    %v212 = vpack.c.bf16 %v211, %v211
    %v213 = vld [vmem:[#allocation8] sm:$0xf]
    %v214 = vld [vmem:[#allocation8 + $0x4] sm:$0xf]
    %v215 = vld [vmem:[#allocation8 + $0x8] sm:$0xf]
    %v216 = vld [vmem:[#allocation8 + $0xc] sm:$0xf]
    %v217 = vld [vmem:[#allocation8 + $0x10] sm:$0xf]
    %v218 = vld [vmem:[#allocation8 + $0x14] sm:$0xf]
    %v219 = vld [vmem:[#allocation8 + $0x18] sm:$0xf]
    %v220 = vld [vmem:[#allocation8 + $0x1c] sm:$0xf]
    %v221 = vld [vmem:[#allocation8 + $0x20] sm:$0xf]
    %v222 = vld [vmem:[#allocation8 + $0x24] sm:$0xf]
    %v223 = vld [vmem:[#allocation8 + $0x28] sm:$0xf]
    %v224 = vld [vmem:[#allocation8 + $0x2c] sm:$0xf]
    %v225 = vld [vmem:[#allocation8 + $0x30] sm:$0xf]
    %v226 = vld [vmem:[#allocation8 + $0x34] sm:$0xf]
    %v227 = vld [vmem:[#allocation8 + $0x38] sm:$0xf]
    %v228 = vld [vmem:[#allocation8 + $0x3c] sm:$0xf]
    %v229 = vld [vmem:[%s6] sm:$0x1]
    %v231 = vperm.slane %v229, 0
    %v249 = vunpack.c.l.b16 %v213
    %v250 = vunpack.c.l.b16 %v214
    %v251 = vunpack.c.l.b16 %v215
    %v252 = vunpack.c.l.b16 %v216
    %v253 = vunpack.c.l.b16 %v217
    %v254 = vunpack.c.l.b16 %v218
    %v255 = vunpack.c.l.b16 %v219
    %v256 = vunpack.c.l.b16 %v220
    %v257 = vunpack.c.l.b16 %v221
    %v258 = vunpack.c.l.b16 %v222
    %v259 = vunpack.c.l.b16 %v223
    %v260 = vunpack.c.l.b16 %v224
    %v261 = vunpack.c.l.b16 %v225
    %v262 = vunpack.c.l.b16 %v226
    %v263 = vunpack.c.l.b16 %v227
    %v264 = vunpack.c.l.b16 %v228
    %v265 = vpack.c.b16 %v250, %v249
    %v266 = vpack.c.b16 %v252, %v251
    %v267 = vpack.c.b16 %v254, %v253
    %v268 = vpack.c.b16 %v256, %v255
    %v269 = vpack.c.b16 %v258, %v257
    %v270 = vpack.c.b16 %v260, %v259
    %v271 = vpack.c.b16 %v262, %v261
    %v272 = vpack.c.b16 %v264, %v263
    %281 = vmatpush.bf16.msra.mxu0 %v272
    %282 = vmatpush.bf16.msra.mxu0 %v271
    %283 = vmatpush.bf16.msra.mxu0 %v270
    %284 = vmatpush.bf16.msra.mxu0 %v269
    %285 = vmatpush.bf16.msra.mxu0 %v268
    %286 = vmatpush.bf16.msra.mxu0 %v267
    %287 = vmatpush.bf16.msra.mxu0 %v266
    %288 = vmatpush.bf16.msra.mxu0 %v265
    %289 = vmatmul.bf16.gmra.mxu0 %v212
    %v290 = vpop.f32.mrf.mxu0
    %v291 = vadd.f32 %v231, %v290
    %v292 = vpop.f32.mrf.mxu0
    %293 = vdwg.mxu0
    %v294 = vlaneseq
    %v295 = vand.u32 %v294, 127
    %vm296 = vcmp.ge.s32.totalorder %v295, 4
    %vm297 = vcmp.lt.s32.totalorder %v295, 8
    %vm298 = vmand %vm296, %vm297
    %v299 = vmul.f32 %v291, 1.442695
    %v300 = vpow.pop %v299
    %v301 = vsel %vm298, %v300, %v291
    %302 = vst [vmem:[#allocation10] sm:$0xff] %v301
    // Predicated region
    $region46: #{tpu_custom_call.1} parent=1 // pred_check
      _
    $region47: #{tpu_custom_call.1} parent=1 // pred_check_branch
      %304 = sbr.rel (0) target = $region49
    $region48: #{tpu_custom_call.1} parent=1 // pred_region
      %306 = vsyncadd [#allocation4], 0
      %s308 = sshll.u32 [#allocation10], 4
      %s309 = int_to_ptr.vmem [resolvable:$true] %s308
      %s310 = sshll.u32 %s7, 4
      %s311 = int_to_ptr.hbm [resolvable:$true] %s310
      %313 = dma.vmem_to_hbm [thread:$0]  %s309, 128, %s311, [#allocation4]
    $region49: #{tpu_custom_call.1} parent=1 // pred_fallthru
      _
    // Predicated region
    $region50: #{tpu_custom_call.1} parent=1 // pred_check
      _
    $region51: #{tpu_custom_call.1} parent=1 // pred_check_branch
      %315 = sbr.rel (0) target = $region53
    $region52: #{tpu_custom_call.1} parent=1 // pred_region
      %317 = dma.done [#allocation4], 128
    $region53: #{tpu_custom_call.1} parent=1 // pred_fallthru
      _
    %318 = vsyncpa [#allocation3], 1
    %319 = vsyncpa [#allocation6], 1
    %320 = vsyncpa [#allocation9], 1
    %321 = vsyncpa [#allocation4], 1

</llo_original>
